<compile_context>
chip_gen: v7x
topology: tpu7x:2x2x1
jax: 0.10.0
libtpu: 0.0.40
codegen_flags: <defaults>
</compile_context>

<pallas_src>
import functools

import jax
import jax.numpy as jnp
from jax import lax
from jax.experimental import pallas as pl
from jax.experimental.pallas import tpu as pltpu


def _round_up(x: int, m: int) -> int:
    return ((x + m - 1) // m) * m


def _tile_and_pad(dim: int, max_tile: int, align: int):
    """Choose (tile, padded_dim) for one array dimension.

    If the dim fits in a single block, use the full (possibly unaligned)
    extent -- full-extent blocks are exempt from the (8,128) constraint -- and
    pad nothing.  Otherwise balance the dim over ceil(dim/max_tile) aligned
    tiles so padding never exceeds one alignment unit per tile.
    """
    if dim <= max_tile:
        return dim, dim
    dim_al = _round_up(dim, align)
    n_tiles = -(-dim_al // max_tile)
    tile = _round_up(-(-dim_al // n_tiles), align)
    return tile, tile * n_tiles


def _linear_sigmoid_kernel(b_ref, wT_ref, x_ref, o_ref, *, cast_bf16):
    # b_ref : (1,) f32   scalar-prefetched bias (SMEM)
    # wT_ref: (tk, td) f32 tile of w.T (K x D layout, pre-transposed once)
    # x_ref : (td, tn) f32 tile of x   (D x N layout)
    # o_ref : (tk, tn) f32 output tile; block index is constant along the d
    #         axis, so it stays resident in VMEM and doubles as the accumulator.
    d = pl.program_id(2)

    lhs = wT_ref[...]
    rhs = x_ref[...]
    if cast_bf16:
        # Only when K is large enough for the MXU to be the bottleneck.
        contrib = jnp.dot(lhs.astype(jnp.bfloat16), rhs.astype(jnp.bfloat16),
                          preferred_element_type=jnp.float32)
    else:
        # Memory-bound regime: full-precision f32 matmul is free and exact.
        contrib = jnp.dot(lhs, rhs, preferred_element_type=jnp.float32,
                          precision=lax.Precision.HIGHEST)

    @pl.when(d == 0)
    def _():
        o_ref[...] = contrib

    @pl.when(d > 0)
    def _():
        o_ref[...] += contrib

    @pl.when(d == pl.num_programs(2) - 1)
    def _():
        # f32 epilogue (bias + sigmoid) -- safe on v5e (no bf16 VPU/EUP).
        o_ref[...] = jax.nn.sigmoid(o_ref[...] + b_ref[0])


# Tile caps (f32 operands).  Double-buffered worst case:
#   2 * (512*1024 + 1024*1024 + 512*1024) * 4 B  ~= 16 MiB
# -> comfortably inside v7x's 64 MiB VMEM, large enough for ~86% HBM roofline.
_TK_MAX = 512     # output rows (usually all of K -> x streamed exactly once)
_TN_MAX = 1024    # output cols (lane-dense, %128)
_TD_MAX = 1024    # reduction tile


@jax.jit
def linear_classifier_forward(w, b, x):
    """sigmoid(w.T @ x + b) via a tiled, pipelined Pallas TPU kernel.

    w: (D, K) float32   (same layout as the numpy array in the torch module)
    b: scalar float32
    x: (D, N) float32   (column vectors of samples, matching `w.T @ x`)
    returns: (K, N) float32
    """
    w = jnp.asarray(w, jnp.float32)
    x = jnp.asarray(x, jnp.float32)
    b_arr = jnp.asarray(b, jnp.float32).reshape(1)

    D, K = w.shape
    D2, N = x.shape
    assert D == D2, "feature dims of w and x must match"

    # ---- per-dim tile choice; pad only genuinely misaligned remainders ----
    tk, K_pad = _tile_and_pad(K, _TK_MAX, 8)     # f32 sublane granule
    tn, N_pad = _tile_and_pad(N, _TN_MAX, 128)   # lane-dense output
    td, D_pad = _tile_and_pad(D, _TD_MAX, 128)

    # v7x megacore: K usually fits in one tile, so split N across the two
    # TensorCores whenever that costs no extra padding.
    if K_pad == tk and N_pad == tn and N_pad >= 256 and N_pad % 256 == 0:
        tn = N_pad // 2

    grid = (K_pad // tk, N_pad // tn, D_pad // td)

    # ---- one-time layout prep (native f32; no bf16 round-trip via HBM) ----
    wT = w.T                                     # (K, D); tiny one-off transpose
    if K_pad != K or D_pad != D:
        wT = jnp.pad(wT, ((0, K_pad - K), (0, D_pad - D)))
    x_p = x
    if D_pad != D or N_pad != N:
        x_p = jnp.pad(x_p, ((0, D_pad - D), (0, N_pad - N)))

    cast_bf16 = K >= 128                         # bf16 only when MXU-relevant
    kernel = functools.partial(_linear_sigmoid_kernel, cast_bf16=cast_bf16)

    out_padded = pl.pallas_call(
        kernel,
        out_shape=jax.ShapeDtypeStruct((K_pad, N_pad), jnp.float32),
        grid_spec=pltpu.PrefetchScalarGridSpec(
            num_scalar_prefetch=1,               # bias lands in SMEM
            grid=grid,
            in_specs=[
                pl.BlockSpec((tk, td), lambda i, j, d, b_ref: (i, d)),  # w.T
                pl.BlockSpec((td, tn), lambda i, j, d, b_ref: (d, j)),  # x
            ],
            out_specs=pl.BlockSpec((tk, tn), lambda i, j, d, b_ref: (i, j)),
        ),
        compiler_params=pltpu.CompilerParams(
            dimension_semantics=("parallel", "parallel", "arbitrary"),
            vmem_limit_bytes=48 << 20,           # < v7x 64 MiB; ample on v5e/v6e
        ),
        # TODO(synk): if profiling shows exposed DMA on the x stream, add
        # pipeline_mode=pl.Buffered(3) on the x BlockSpec (budget allows it).
    )(b_arr, wT, x_p)

    if K_pad != K or N_pad != N:
        return out_padded[:K, :N]
    return out_padded


if __name__ == "__main__":
    key = jax.random.PRNGKey(0)
    k_w, k_b, k_x = jax.random.split(key, 3)

    D, K, N = 32, 8, 16  # 32 features, 8 outputs, batch of 16 column vectors
    w = jax.random.normal(k_w, (D, K), dtype=jnp.float32)
    b = jax.random.normal(k_b, (), dtype=jnp.float32)
    x = jax.random.normal(k_x, (D, N), dtype=jnp.float32)

    y = linear_classifier_forward(w, b, x)
    y = jax.block_until_ready(y)

    # Reference check against plain JAX (full-precision dot).
    y_ref = jax.nn.sigmoid(jnp.dot(w.T, x, precision=lax.Precision.HIGHEST) + b)
    assert y.shape == (K, N)
    err = float(jnp.max(jnp.abs(y - y_ref)))
    assert err < 5e-3, err

    print("KERNEL_OK")
</pallas_src>

<mosaic_0001>
module attributes {stable_mosaic.version = 11 : i64} {
  func.func @_linear_sigmoid_kernel(%arg0: i32, %arg1: i32, %arg2: i32, %arg3: memref<1xf32, #tpu.memory_space<smem>>, %arg4: memref<8x32xf32, #tpu.memory_space<vmem>>, %arg5: memref<32x16xf32, #tpu.memory_space<vmem>>, %arg6: memref<8x16xf32, #tpu.memory_space<vmem>>) attributes {dimension_semantics = [#tpu.dimension_semantics<parallel>, #tpu.dimension_semantics<parallel>, #tpu.dimension_semantics<arbitrary>], iteration_bounds = array<i64: 1, 1, 1>, scalar_prefetch = 1 : i64, scratch_operands = 0 : i64, tpu.core_type = #tpu.core_type<tc>, window_params = [{transform_indices = @transform_0, window_bounds = array<i64: 8, 32>}, {transform_indices = @transform_1, window_bounds = array<i64: 32, 16>}, {transform_indices = @transform_2, window_bounds = array<i64: 8, 16>}]} {
    %c0 = arith.constant 0 : index
    %c0_0 = arith.constant 0 : index
    %0 = vector.load %arg4[%c0, %c0_0] : memref<8x32xf32, #tpu.memory_space<vmem>>, vector<8x32xf32>
    %c0_1 = arith.constant 0 : index
    %c0_2 = arith.constant 0 : index
    %1 = vector.load %arg5[%c0_1, %c0_2] : memref<32x16xf32, #tpu.memory_space<vmem>>, vector<32x16xf32>
    %cst = arith.constant dense<0.000000e+00> : vector<8x16xf32>
    %2 = tpu.matmul %0, %1, %cst {dimension_numbers = #tpu.dot_dimension_numbers<[1], [0], [0], [1], [0, 0, 1, 1], [], []>, precision = #tpu.contract_precision<fp32>} : vector<8x32xf32>, vector<32x16xf32>, vector<8x16xf32> -> vector<8x16xf32>
    %c0_i32 = arith.constant 0 : i32
    %3 = arith.cmpi eq, %arg2, %c0_i32 : i32
    %4 = arith.extui %3 : i1 to i32
    %c0_i32_3 = arith.constant 0 : i32
    %5 = arith.cmpi ne, %4, %c0_i32_3 : i32
    scf.if %5 {
      %c0_8 = arith.constant 0 : index
      %c0_9 = arith.constant 0 : index
      %12 = vector.load %arg6[%c0_8, %c0_9] : memref<8x16xf32, #tpu.memory_space<vmem>>, vector<8x16xf32>
      tpu.vector_store %arg6[%c0_8, %c0_9], %2 {strides = array<i32>} : memref<8x16xf32, #tpu.memory_space<vmem>>, vector<8x16xf32>,
    } else {
    }
    %c0_i32_4 = arith.constant 0 : i32
    %6 = arith.cmpi sgt, %arg2, %c0_i32_4 : i32
    %7 = arith.extui %6 : i1 to i32
    %c0_i32_5 = arith.constant 0 : i32
    %8 = arith.cmpi ne, %7, %c0_i32_5 : i32
    scf.if %8 {
      %c0_8 = arith.constant 0 : index
      %c0_9 = arith.constant 0 : index
      %12 = vector.load %arg6[%c0_8, %c0_9] : memref<8x16xf32, #tpu.memory_space<vmem>>, vector<8x16xf32>
      %13 = arith.addf %12, %2 : vector<8x16xf32>
      %c0_10 = arith.constant 0 : index
      %c0_11 = arith.constant 0 : index
      %14 = vector.load %arg6[%c0_10, %c0_11] : memref<8x16xf32, #tpu.memory_space<vmem>>, vector<8x16xf32>
      tpu.vector_store %arg6[%c0_10, %c0_11], %13 {strides = array<i32>} : memref<8x16xf32, #tpu.memory_space<vmem>>, vector<8x16xf32>,
    } else {
    }
    %c0_i32_6 = arith.constant 0 : i32
    %9 = arith.cmpi eq, %arg2, %c0_i32_6 : i32
    %10 = arith.extui %9 : i1 to i32
    %c0_i32_7 = arith.constant 0 : i32
    %11 = arith.cmpi ne, %10, %c0_i32_7 : i32
    scf.if %11 {
      %c0_8 = arith.constant 0 : index
      %c0_9 = arith.constant 0 : index
      %12 = vector.load %arg6[%c0_8, %c0_9] : memref<8x16xf32, #tpu.memory_space<vmem>>, vector<8x16xf32>
      %c0_10 = arith.constant 0 : index
      %13 = memref.load %arg3[%c0_10] : memref<1xf32, #tpu.memory_space<smem>>
      %14 = vector.broadcast %13 : f32 to vector<8x16xf32>
      %15 = arith.addf %12, %14 : vector<8x16xf32>
      %16 = arith.negf %15 : vector<8x16xf32>
      %17 = math.exp %16 : vector<8x16xf32>
      %cst_11 = arith.constant 1.000000e+00 : f32
      %18 = vector.broadcast %cst_11 : f32 to vector<8x16xf32>
      %19 = arith.addf %18, %17 : vector<8x16xf32>
      %20 = arith.divf %18, %19 : vector<8x16xf32>
      %c0_12 = arith.constant 0 : index
      %c0_13 = arith.constant 0 : index
      %21 = vector.load %arg6[%c0_12, %c0_13] : memref<8x16xf32, #tpu.memory_space<vmem>>, vector<8x16xf32>
      tpu.vector_store %arg6[%c0_12, %c0_13], %20 {strides = array<i32>} : memref<8x16xf32, #tpu.memory_space<vmem>>, vector<8x16xf32>,
    } else {
    }
    return
  }
  func.func @transform_0(%arg0: i32, %arg1: i32, %arg2: i32, %arg3: memref<1xf32, #tpu.memory_space<smem>>) -> (i32, i32) {
    %c0_i32 = arith.constant 0 : i32
    return %arg0, %arg2 : i32, i32
  }
  func.func @transform_1(%arg0: i32, %arg1: i32, %arg2: i32, %arg3: memref<1xf32, #tpu.memory_space<smem>>) -> (i32, i32) {
    %c0_i32 = arith.constant 0 : i32
    return %arg2, %arg1 : i32, i32
  }
  func.func @transform_2(%arg0: i32, %arg1: i32, %arg2: i32, %arg3: memref<1xf32, #tpu.memory_space<smem>>) -> (i32, i32) {
    %c0_i32 = arith.constant 0 : i32
    return %arg0, %arg1 : i32, i32
  }
}

</mosaic_0001>

<llo_original>
// kernel: linear_classifier_forward.1
$region0: #{linear_classifier_forward.1}
  #allocation0 [shape = 'u32[]', space=smem, size = 0x4, offset = 0x4, fixed_abs, tag = 'smem constant byte address 0x4 - core index']
  #allocation1 [shape = 'u32[144,128]{1,0:T(1,128)}', space=vmem, size = 0x12000, scoped, tag = 'internal scratch']
  #allocation2 [shape = 's32[1]{0}', space=sflag, size = 0x4, scoped, tag = 'scoped memory for linear_classifier_forward.1']
  #allocation3 [shape = 'f32[1]{0:T(128)S(6)}', space=smem, size = 0x200, scoped, tag = 'prefetched SMEM operand 0']
  %s0 = inlined_call_operand.<no memory space> [shape: f32[1], index: 0, kind: input, shape index: {}]
  %s1 = inlined_call_operand.vmem [shape: f32[8,32], index: 1, kind: input, shape index: {}]
  %s2 = inlined_call_operand.vmem [shape: f32[32,16], index: 2, kind: input, shape index: {}]
  %s3 = inlined_call_operand.hbm [shape: f32[8,16], index: 3, kind: output, shape index: {}]
  %s4 = sld [smem:[#allocation0]]
  $region30: #{linear_classifier_forward.1} parent=0
    _
  %s6 = ssub.s32 1, %s4
  %s7 = scalar_select 0, %s6, %s4
  %8 = sst [smem:[#allocation3]] %s0
  $region1: #{linear_classifier_forward.1} parent=0
    #allocation4 [shape = 'u8[4096]{0}', space=vmem, size = 0x1000, scoped, tag = 'output window, operand 0, single buffered']
    #allocation5 [shape = 's32[1]{0}', space=sflag, size = 0x4, scoped, tag = 'scoped memory for linear_classifier_forward.1']
    %9 = vsyncpa [#allocation5], 0
    // Predicated region
    $region2: #{linear_classifier_forward.1} parent=1 // pred_check
      _
    $region3: #{linear_classifier_forward.1} parent=1 // pred_check_branch
      %11 = sbr.rel (0) target = $region5
    $region4: #{linear_classifier_forward.1} parent=1 // pred_region
      _
    $region5: #{linear_classifier_forward.1} parent=1 // pred_fallthru
      _
    // Predicated region
    $region6: #{linear_classifier_forward.1} parent=1 // pred_check
      _
    $region7: #{linear_classifier_forward.1} parent=1 // pred_check_branch
      %13 = sbr.rel (0) target = $region9
    $region8: #{linear_classifier_forward.1} parent=1 // pred_region
      _
    $region9: #{linear_classifier_forward.1} parent=1 // pred_fallthru
      _
    %v14 = vld [vmem:[%s1] sm:$0xff]
    %v15 = vld [vmem:[%s2] sm:$0xff]
    %v16 = vld [vmem:[%s2 + $0x8] sm:$0xff]
    %v17 = vld [vmem:[%s2 + $0x10] sm:$0xff]
    %v18 = vld [vmem:[%s2 + $0x18] sm:$0xff]
    %vm19 = vcmask 261120
    %v21 = vsel %vm19, %v14, 0
    %23 = vmatprep.subr.mxu0 0.0
    %v24 = vand.u32 %v15, 4294901760
    %25 = vmatpush1.msra.mxu0 %v24
    %26 = vmatprep.subr.mxu0 0.0
    %v27 = vand.u32 %v16, 4294901760
    %28 = vmatpush1.msra.mxu0 %v27
    %29 = vmatprep.subr.mxu0 0.0
    %v30 = vand.u32 %v17, 4294901760
    %31 = vmatpush1.msra.mxu0 %v30
    %32 = vmatprep.subr.mxu0 0.0
    %v33 = vand.u32 %v18, 4294901760
    %34 = vmatpush1.msra.mxu0 %v33
    %35 = vmatprep.subr.mxu0 0.0
    %36 = vmatpush1.msra.mxu0 0.0
    %37 = vmatprep.subr.mxu0 0.0
    %38 = vmatpush1.msra.mxu0 0.0
    %39 = vmatprep.subr.mxu0 0.0
    %40 = vmatpush1.msra.mxu0 0.0
    %41 = vmatprep.subr.mxu0 0.0
    %42 = vmatpush1.msra.mxu0 0.0
    %43 = vmatprep.subr.mxu0 0.0
    %44 = vmatpush1.msra.mxu0 0.0
    %45 = vmatprep.subr.mxu0 0.0
    %46 = vmatpush1.msra.mxu0 0.0
    %47 = vmatprep.subr.mxu0 0.0
    %48 = vmatpush1.msra.mxu0 0.0
    %49 = vmatprep.subr.mxu0 0.0
    %50 = vmatpush1.msra.mxu0 0.0
    %51 = vmatprep.subr.mxu0 0.0
    %52 = vmatpush1.msra.mxu0 0.0
    %53 = vmatprep.subr.mxu0 0.0
    %54 = vmatpush1.msra.mxu0 0.0
    %55 = vmatprep.subr.mxu0 0.0
    %56 = vmatpush1.msra.mxu0 0.0
    %57 = vmatprep.subr.mxu0 0.0
    %58 = vmatpush1.msra.mxu0 0.0
    %59 = vmatprep.subr.mxu0 0.0
    %60 = vmatpush1.msra.mxu0 0.0
    %61 = vmatprep.subr.mxu0 0.0
    %62 = vmatpush1.msra.mxu0 0.0
    %63 = vmatprep.subr.mxu0 0.0
    %64 = vmatpush1.msra.mxu0 0.0
    %65 = vmatprep.subr.mxu0 0.0
    %66 = vmatpush1.msra.mxu0 0.0
    %67 = vmatprep.subr.mxu0 0.0
    %68 = vmatpush1.msra.mxu0 0.0
    %69 = vmatprep.subr.mxu0 0.0
    %70 = vmatpush1.msra.mxu0 0.0
    %71 = vmatprep.subr.mxu0 0.0
    %72 = vmatpush1.msra.mxu0 0.0
    %73 = vmatprep.subr.mxu0 0.0
    %74 = vmatpush1.msra.mxu0 0.0
    %75 = vmatprep.subr.mxu0 0.0
    %76 = vmatpush1.msra.mxu0 0.0
    %77 = vmatprep.subr.mxu0 0.0
    %78 = vmatpush1.msra.mxu0 0.0
    %79 = vmatprep.subr.mxu0 0.0
    %80 = vmatpush1.msra.mxu0 0.0
    %81 = vmatprep.subr.mxu0 0.0
    %82 = vmatpush1.msra.mxu0 0.0
    %83 = vmatprep.subr.mxu0 0.0
    %84 = vmatpush1.msra.mxu0 0.0
    %85 = vmatprep.subr.mxu0 0.0
    %86 = vmatpush1.msra.mxu0 0.0
    %87 = vmatprep.subr.mxu0 0.0
    %88 = vmatpush1.msra.mxu0 0.0
    %89 = vmatprep.subr.mxu0 0.0
    %90 = vmatpush1.msra.mxu0 0.0
    %91 = vmatprep.mubr.f32.mxu0 0.0
    %v92 = vand.u32 %v21, 4294901760
    %v93 = vsub.f32 %v21, %v92
    %v94 = vand.u32 %v93, 4294901760
    %v95 = vsub.f32 %v93, %v94
    %v96 = vand.u32 %v95, 4294901760
    %97 = vmatmul.mubr.f32.gmra.mrb[0].mxu0 %v96
    %v98 = vpop.f32.mrb[0].mxu0
    %v99 = vadd.f32 0.0, %v98
    %v100 = vpop.f32.mrb[0].mxu0
    %101 = vdwg.mxu0
    %102 = vmatprep.subr.mxu0 0.0
    %v103 = vand.u32 %v15, 4294901760
    %v104 = vsub.f32 %v15, %v103
    %v105 = vand.u32 %v104, 4294901760
    %v106 = vsub.f32 %v104, %v105
    %v107 = vand.u32 %v106, 4294901760
    %108 = vmatpush1.msra.mxu0 %v107
    %109 = vmatprep.subr.mxu0 0.0
    %v110 = vand.u32 %v16, 4294901760
    %v111 = vsub.f32 %v16, %v110
    %v112 = vand.u32 %v111, 4294901760
    %v113 = vsub.f32 %v111, %v112
    %v114 = vand.u32 %v113, 4294901760
    %115 = vmatpush1.msra.mxu0 %v114
    %116 = vmatprep.subr.mxu0 0.0
    %v117 = vand.u32 %v17, 4294901760
    %v118 = vsub.f32 %v17, %v117
    %v119 = vand.u32 %v118, 4294901760
    %v120 = vsub.f32 %v118, %v119
    %v121 = vand.u32 %v120, 4294901760
    %122 = vmatpush1.msra.mxu0 %v121
    %123 = vmatprep.subr.mxu0 0.0
    %v124 = vand.u32 %v18, 4294901760
    %v125 = vsub.f32 %v18, %v124
    %v126 = vand.u32 %v125, 4294901760
    %v127 = vsub.f32 %v125, %v126
    %v128 = vand.u32 %v127, 4294901760
    %129 = vmatpush1.msra.mxu0 %v128
    %130 = vmatprep.subr.mxu0 0.0
    %131 = vmatpush1.msra.mxu0 0.0
    %132 = vmatprep.subr.mxu0 0.0
    %133 = vmatpush1.msra.mxu0 0.0
    %134 = vmatprep.subr.mxu0 0.0
    %135 = vmatpush1.msra.mxu0 0.0
    %136 = vmatprep.subr.mxu0 0.0
    %137 = vmatpush1.msra.mxu0 0.0
    %138 = vmatprep.subr.mxu0 0.0
    %139 = vmatpush1.msra.mxu0 0.0
    %140 = vmatprep.subr.mxu0 0.0
    %141 = vmatpush1.msra.mxu0 0.0
    %142 = vmatprep.subr.mxu0 0.0
    %143 = vmatpush1.msra.mxu0 0.0
    %144 = vmatprep.subr.mxu0 0.0
    %145 = vmatpush1.msra.mxu0 0.0
    %146 = vmatprep.subr.mxu0 0.0
    %147 = vmatpush1.msra.mxu0 0.0
    %148 = vmatprep.subr.mxu0 0.0
    %149 = vmatpush1.msra.mxu0 0.0
    %150 = vmatprep.subr.mxu0 0.0
    %151 = vmatpush1.msra.mxu0 0.0
    %152 = vmatprep.subr.mxu0 0.0
    %153 = vmatpush1.msra.mxu0 0.0
    %154 = vmatprep.subr.mxu0 0.0
    %155 = vmatpush1.msra.mxu0 0.0
    %156 = vmatprep.subr.mxu0 0.0
    %157 = vmatpush1.msra.mxu0 0.0
    %158 = vmatprep.subr.mxu0 0.0
    %159 = vmatpush1.msra.mxu0 0.0
    %160 = vmatprep.subr.mxu0 0.0
    %161 = vmatpush1.msra.mxu0 0.0
    %162 = vmatprep.subr.mxu0 0.0
    %163 = vmatpush1.msra.mxu0 0.0
    %164 = vmatprep.subr.mxu0 0.0
    %165 = vmatpush1.msra.mxu0 0.0
    %166 = vmatprep.subr.mxu0 0.0
    %167 = vmatpush1.msra.mxu0 0.0
    %168 = vmatprep.subr.mxu0 0.0
    %169 = vmatpush1.msra.mxu0 0.0
    %170 = vmatprep.subr.mxu0 0.0
    %171 = vmatpush1.msra.mxu0 0.0
    %172 = vmatprep.subr.mxu0 0.0
    %173 = vmatpush1.msra.mxu0 0.0
    %174 = vmatprep.subr.mxu0 0.0
    %175 = vmatpush1.msra.mxu0 0.0
    %176 = vmatprep.subr.mxu0 0.0
    %177 = vmatpush1.msra.mxu0 0.0
    %178 = vmatprep.subr.mxu0 0.0
    %179 = vmatpush1.msra.mxu0 0.0
    %180 = vmatprep.subr.mxu0 0.0
    %181 = vmatpush1.msra.mxu0 0.0
    %182 = vmatprep.subr.mxu0 0.0
    %183 = vmatpush1.msra.mxu0 0.0
    %184 = vmatprep.subr.mxu0 0.0
    %185 = vmatpush1.msra.mxu0 0.0
    %186 = vmatprep.mubr.f32.mxu0 0.0
    %v187 = vand.u32 %v21, 4294901760
    %188 = vmatmul.mubr.f32.gmra.mrb[0].mxu0 %v187
    %v189 = vpop.f32.mrb[0].mxu0
    %v190 = vadd.f32 %v99, %v189
    %v191 = vpop.f32.mrb[0].mxu0
    %192 = vdwg.mxu0
    %193 = vmatprep.subr.mxu0 0.0
    %v194 = vand.u32 %v15, 4294901760
    %v195 = vsub.f32 %v15, %v194
    %196 = vmatpush1.msra.mxu0 %v195
    %197 = vmatprep.subr.mxu0 0.0
    %v198 = vand.u32 %v16, 4294901760
    %v199 = vsub.f32 %v16, %v198
    %200 = vmatpush1.msra.mxu0 %v199
    %201 = vmatprep.subr.mxu0 0.0
    %v202 = vand.u32 %v17, 4294901760
    %v203 = vsub.f32 %v17, %v202
    %204 = vmatpush1.msra.mxu0 %v203
    %205 = vmatprep.subr.mxu0 0.0
    %v206 = vand.u32 %v18, 4294901760
    %v207 = vsub.f32 %v18, %v206
    %208 = vmatpush1.msra.mxu0 %v207
    %209 = vmatprep.subr.mxu0 0.0
    %210 = vmatpush1.msra.mxu0 0.0
    %211 = vmatprep.subr.mxu0 0.0
    %212 = vmatpush1.msra.mxu0 0.0
    %213 = vmatprep.subr.mxu0 0.0
    %214 = vmatpush1.msra.mxu0 0.0
    %215 = vmatprep.subr.mxu0 0.0
    %216 = vmatpush1.msra.mxu0 0.0
    %217 = vmatprep.subr.mxu0 0.0
    %218 = vmatpush1.msra.mxu0 0.0
    %219 = vmatprep.subr.mxu0 0.0
    %220 = vmatpush1.msra.mxu0 0.0
    %221 = vmatprep.subr.mxu0 0.0
    %222 = vmatpush1.msra.mxu0 0.0
    %223 = vmatprep.subr.mxu0 0.0
    %224 = vmatpush1.msra.mxu0 0.0
    %225 = vmatprep.subr.mxu0 0.0
    %226 = vmatpush1.msra.mxu0 0.0
    %227 = vmatprep.subr.mxu0 0.0
    %228 = vmatpush1.msra.mxu0 0.0
    %229 = vmatprep.subr.mxu0 0.0
    %230 = vmatpush1.msra.mxu0 0.0
    %231 = vmatprep.subr.mxu0 0.0
    %232 = vmatpush1.msra.mxu0 0.0
    %233 = vmatprep.subr.mxu0 0.0
    %234 = vmatpush1.msra.mxu0 0.0
    %235 = vmatprep.subr.mxu0 0.0
    %236 = vmatpush1.msra.mxu0 0.0
    %237 = vmatprep.subr.mxu0 0.0
    %238 = vmatpush1.msra.mxu0 0.0
    %239 = vmatprep.subr.mxu0 0.0
    %240 = vmatpush1.msra.mxu0 0.0
    %241 = vmatprep.subr.mxu0 0.0
    %242 = vmatpush1.msra.mxu0 0.0
    %243 = vmatprep.subr.mxu0 0.0
    %244 = vmatpush1.msra.mxu0 0.0
    %245 = vmatprep.subr.mxu0 0.0
    %246 = vmatpush1.msra.mxu0 0.0
    %247 = vmatprep.subr.mxu0 0.0
    %248 = vmatpush1.msra.mxu0 0.0
    %249 = vmatprep.subr.mxu0 0.0
    %250 = vmatpush1.msra.mxu0 0.0
    %251 = vmatprep.subr.mxu0 0.0
    %252 = vmatpush1.msra.mxu0 0.0
    %253 = vmatprep.subr.mxu0 0.0
    %254 = vmatpush1.msra.mxu0 0.0
    %255 = vmatprep.subr.mxu0 0.0
    %256 = vmatpush1.msra.mxu0 0.0
    %257 = vmatprep.subr.mxu0 0.0
    %258 = vmatpush1.msra.mxu0 0.0
    %259 = vmatprep.subr.mxu0 0.0
    %260 = vmatpush1.msra.mxu0 0.0
    %261 = vmatprep.subr.mxu0 0.0
    %262 = vmatpush1.msra.mxu0 0.0
    %263 = vmatprep.subr.mxu0 0.0
    %264 = vmatpush1.msra.mxu0 0.0
    %265 = vmatprep.mubr.f32.mxu0 0.0
    %v266 = vand.u32 %v21, 4294901760
    %v267 = vsub.f32 %v21, %v266
    %268 = vmatmul.mubr.f32.gmra.mrb[0].mxu0 %v267
    %v269 = vpop.f32.mrb[0].mxu0
    %v270 = vadd.f32 %v190, %v269
    %v271 = vpop.f32.mrb[0].mxu0
    %272 = vdwg.mxu0
    %273 = vmatprep.subr.mxu0 0.0
    %v274 = vand.u32 %v15, 4294901760
    %275 = vmatpush1.msra.mxu0 %v274
    %276 = vmatprep.subr.mxu0 0.0
    %v277 = vand.u32 %v16, 4294901760
    %278 = vmatpush1.msra.mxu0 %v277
    %279 = vmatprep.subr.mxu0 0.0
    %v280 = vand.u32 %v17, 4294901760
    %281 = vmatpush1.msra.mxu0 %v280
    %282 = vmatprep.subr.mxu0 0.0
    %v283 = vand.u32 %v18, 4294901760
    %284 = vmatpush1.msra.mxu0 %v283
    %285 = vmatprep.subr.mxu0 0.0
    %286 = vmatpush1.msra.mxu0 0.0
    %287 = vmatprep.subr.mxu0 0.0
    %288 = vmatpush1.msra.mxu0 0.0
    %289 = vmatprep.subr.mxu0 0.0
    %290 = vmatpush1.msra.mxu0 0.0
    %291 = vmatprep.subr.mxu0 0.0
    %292 = vmatpush1.msra.mxu0 0.0
    %293 = vmatprep.subr.mxu0 0.0
    %294 = vmatpush1.msra.mxu0 0.0
    %295 = vmatprep.subr.mxu0 0.0
    %296 = vmatpush1.msra.mxu0 0.0
    %297 = vmatprep.subr.mxu0 0.0
    %298 = vmatpush1.msra.mxu0 0.0
    %299 = vmatprep.subr.mxu0 0.0
    %300 = vmatpush1.msra.mxu0 0.0
    %301 = vmatprep.subr.mxu0 0.0
    %302 = vmatpush1.msra.mxu0 0.0
    %303 = vmatprep.subr.mxu0 0.0
    %304 = vmatpush1.msra.mxu0 0.0
    %305 = vmatprep.subr.mxu0 0.0
    %306 = vmatpush1.msra.mxu0 0.0
    %307 = vmatprep.subr.mxu0 0.0
    %308 = vmatpush1.msra.mxu0 0.0
    %309 = vmatprep.subr.mxu0 0.0
    %310 = vmatpush1.msra.mxu0 0.0
    %311 = vmatprep.subr.mxu0 0.0
    %312 = vmatpush1.msra.mxu0 0.0
    %313 = vmatprep.subr.mxu0 0.0
    %314 = vmatpush1.msra.mxu0 0.0
    %315 = vmatprep.subr.mxu0 0.0
    %316 = vmatpush1.msra.mxu0 0.0
    %317 = vmatprep.subr.mxu0 0.0
    %318 = vmatpush1.msra.mxu0 0.0
    %319 = vmatprep.subr.mxu0 0.0
    %320 = vmatpush1.msra.mxu0 0.0
    %321 = vmatprep.subr.mxu0 0.0
    %322 = vmatpush1.msra.mxu0 0.0
    %323 = vmatprep.subr.mxu0 0.0
    %324 = vmatpush1.msra.mxu0 0.0
    %325 = vmatprep.subr.mxu0 0.0
    %326 = vmatpush1.msra.mxu0 0.0
    %327 = vmatprep.subr.mxu0 0.0
    %328 = vmatpush1.msra.mxu0 0.0
    %329 = vmatprep.subr.mxu0 0.0
    %330 = vmatpush1.msra.mxu0 0.0
    %331 = vmatprep.subr.mxu0 0.0
    %332 = vmatpush1.msra.mxu0 0.0
    %333 = vmatprep.subr.mxu0 0.0
    %334 = vmatpush1.msra.mxu0 0.0
    %335 = vmatprep.subr.mxu0 0.0
    %336 = vmatpush1.msra.mxu0 0.0
    %337 = vmatprep.subr.mxu0 0.0
    %338 = vmatpush1.msra.mxu0 0.0
    %339 = vmatprep.subr.mxu0 0.0
    %340 = vmatpush1.msra.mxu0 0.0
    %341 = vmatprep.mubr.f32.mxu0 0.0
    %v342 = vand.u32 %v21, 4294901760
    %v343 = vsub.f32 %v21, %v342
    %v344 = vand.u32 %v343, 4294901760
    %345 = vmatmul.mubr.f32.gmra.mrb[0].mxu0 %v344
    %v346 = vpop.f32.mrb[0].mxu0
    %v347 = vadd.f32 %v270, %v346
    %v348 = vpop.f32.mrb[0].mxu0
    %349 = vdwg.mxu0
    %350 = vmatprep.subr.mxu0 0.0
    %v351 = vand.u32 %v15, 4294901760
    %v352 = vsub.f32 %v15, %v351
    %v353 = vand.u32 %v352, 4294901760
    %354 = vmatpush1.msra.mxu0 %v353
    %355 = vmatprep.subr.mxu0 0.0
    %v356 = vand.u32 %v16, 4294901760
    %v357 = vsub.f32 %v16, %v356
    %v358 = vand.u32 %v357, 4294901760
    %359 = vmatpush1.msra.mxu0 %v358
    %360 = vmatprep.subr.mxu0 0.0
    %v361 = vand.u32 %v17, 4294901760
    %v362 = vsub.f32 %v17, %v361
    %v363 = vand.u32 %v362, 4294901760
    %364 = vmatpush1.msra.mxu0 %v363
    %365 = vmatprep.subr.mxu0 0.0
    %v366 = vand.u32 %v18, 4294901760
    %v367 = vsub.f32 %v18, %v366
    %v368 = vand.u32 %v367, 4294901760
    %369 = vmatpush1.msra.mxu0 %v368
    %370 = vmatprep.subr.mxu0 0.0
    %371 = vmatpush1.msra.mxu0 0.0
    %372 = vmatprep.subr.mxu0 0.0
    %373 = vmatpush1.msra.mxu0 0.0
    %374 = vmatprep.subr.mxu0 0.0
    %375 = vmatpush1.msra.mxu0 0.0
    %376 = vmatprep.subr.mxu0 0.0
    %377 = vmatpush1.msra.mxu0 0.0
    %378 = vmatprep.subr.mxu0 0.0
    %379 = vmatpush1.msra.mxu0 0.0
    %380 = vmatprep.subr.mxu0 0.0
    %381 = vmatpush1.msra.mxu0 0.0
    %382 = vmatprep.subr.mxu0 0.0
    %383 = vmatpush1.msra.mxu0 0.0
    %384 = vmatprep.subr.mxu0 0.0
    %385 = vmatpush1.msra.mxu0 0.0
    %386 = vmatprep.subr.mxu0 0.0
    %387 = vmatpush1.msra.mxu0 0.0
    %388 = vmatprep.subr.mxu0 0.0
    %389 = vmatpush1.msra.mxu0 0.0
    %390 = vmatprep.subr.mxu0 0.0
    %391 = vmatpush1.msra.mxu0 0.0
    %392 = vmatprep.subr.mxu0 0.0
    %393 = vmatpush1.msra.mxu0 0.0
    %394 = vmatprep.subr.mxu0 0.0
    %395 = vmatpush1.msra.mxu0 0.0
    %396 = vmatprep.subr.mxu0 0.0
    %397 = vmatpush1.msra.mxu0 0.0
    %398 = vmatprep.subr.mxu0 0.0
    %399 = vmatpush1.msra.mxu0 0.0
    %400 = vmatprep.subr.mxu0 0.0
    %401 = vmatpush1.msra.mxu0 0.0
    %402 = vmatprep.subr.mxu0 0.0
    %403 = vmatpush1.msra.mxu0 0.0
    %404 = vmatprep.subr.mxu0 0.0
    %405 = vmatpush1.msra.mxu0 0.0
    %406 = vmatprep.subr.mxu0 0.0
    %407 = vmatpush1.msra.mxu0 0.0
    %408 = vmatprep.subr.mxu0 0.0
    %409 = vmatpush1.msra.mxu0 0.0
    %410 = vmatprep.subr.mxu0 0.0
    %411 = vmatpush1.msra.mxu0 0.0
    %412 = vmatprep.subr.mxu0 0.0
    %413 = vmatpush1.msra.mxu0 0.0
    %414 = vmatprep.subr.mxu0 0.0
    %415 = vmatpush1.msra.mxu0 0.0
    %416 = vmatprep.subr.mxu0 0.0
    %417 = vmatpush1.msra.mxu0 0.0
    %418 = vmatprep.subr.mxu0 0.0
    %419 = vmatpush1.msra.mxu0 0.0
    %420 = vmatprep.subr.mxu0 0.0
    %421 = vmatpush1.msra.mxu0 0.0
    %422 = vmatprep.subr.mxu0 0.0
    %423 = vmatpush1.msra.mxu0 0.0
    %424 = vmatprep.subr.mxu0 0.0
    %425 = vmatpush1.msra.mxu0 0.0
    %426 = vmatprep.mubr.f32.mxu0 0.0
    %v427 = vand.u32 %v21, 4294901760
    %428 = vmatmul.mubr.f32.gmra.mrb[0].mxu0 %v427
    %v429 = vpop.f32.mrb[0].mxu0
    %v430 = vadd.f32 %v347, %v429
    %v431 = vpop.f32.mrb[0].mxu0
    %432 = vdwg.mxu0
    %433 = vmatprep.subr.mxu0 0.0
    %v434 = vand.u32 %v15, 4294901760
    %435 = vmatpush1.msra.mxu0 %v434
    %436 = vmatprep.subr.mxu0 0.0
    %v437 = vand.u32 %v16, 4294901760
    %438 = vmatpush1.msra.mxu0 %v437
    %439 = vmatprep.subr.mxu0 0.0
    %v440 = vand.u32 %v17, 4294901760
    %441 = vmatpush1.msra.mxu0 %v440
    %442 = vmatprep.subr.mxu0 0.0
    %v443 = vand.u32 %v18, 4294901760
    %444 = vmatpush1.msra.mxu0 %v443
    %445 = vmatprep.subr.mxu0 0.0
    %446 = vmatpush1.msra.mxu0 0.0
    %447 = vmatprep.subr.mxu0 0.0
    %448 = vmatpush1.msra.mxu0 0.0
    %449 = vmatprep.subr.mxu0 0.0
    %450 = vmatpush1.msra.mxu0 0.0
    %451 = vmatprep.subr.mxu0 0.0
    %452 = vmatpush1.msra.mxu0 0.0
    %453 = vmatprep.subr.mxu0 0.0
    %454 = vmatpush1.msra.mxu0 0.0
    %455 = vmatprep.subr.mxu0 0.0
    %456 = vmatpush1.msra.mxu0 0.0
    %457 = vmatprep.subr.mxu0 0.0
    %458 = vmatpush1.msra.mxu0 0.0
    %459 = vmatprep.subr.mxu0 0.0
    %460 = vmatpush1.msra.mxu0 0.0
    %461 = vmatprep.subr.mxu0 0.0
    %462 = vmatpush1.msra.mxu0 0.0
    %463 = vmatprep.subr.mxu0 0.0
    %464 = vmatpush1.msra.mxu0 0.0
    %465 = vmatprep.subr.mxu0 0.0
    %466 = vmatpush1.msra.mxu0 0.0
    %467 = vmatprep.subr.mxu0 0.0
    %468 = vmatpush1.msra.mxu0 0.0
    %469 = vmatprep.subr.mxu0 0.0
    %470 = vmatpush1.msra.mxu0 0.0
    %471 = vmatprep.subr.mxu0 0.0
    %472 = vmatpush1.msra.mxu0 0.0
    %473 = vmatprep.subr.mxu0 0.0
    %474 = vmatpush1.msra.mxu0 0.0
    %475 = vmatprep.subr.mxu0 0.0
    %476 = vmatpush1.msra.mxu0 0.0
    %477 = vmatprep.subr.mxu0 0.0
    %478 = vmatpush1.msra.mxu0 0.0
    %479 = vmatprep.subr.mxu0 0.0
    %480 = vmatpush1.msra.mxu0 0.0
    %481 = vmatprep.subr.mxu0 0.0
    %482 = vmatpush1.msra.mxu0 0.0
    %483 = vmatprep.subr.mxu0 0.0
    %484 = vmatpush1.msra.mxu0 0.0
    %485 = vmatprep.subr.mxu0 0.0
    %486 = vmatpush1.msra.mxu0 0.0
    %487 = vmatprep.subr.mxu0 0.0
    %488 = vmatpush1.msra.mxu0 0.0
    %489 = vmatprep.subr.mxu0 0.0
    %490 = vmatpush1.msra.mxu0 0.0
    %491 = vmatprep.subr.mxu0 0.0
    %492 = vmatpush1.msra.mxu0 0.0
    %493 = vmatprep.subr.mxu0 0.0
    %494 = vmatpush1.msra.mxu0 0.0
    %495 = vmatprep.subr.mxu0 0.0
    %496 = vmatpush1.msra.mxu0 0.0
    %497 = vmatprep.subr.mxu0 0.0
    %498 = vmatpush1.msra.mxu0 0.0
    %499 = vmatprep.subr.mxu0 0.0
    %500 = vmatpush1.msra.mxu0 0.0
    %501 = vmatprep.mubr.f32.mxu0 0.0
    %v502 = vand.u32 %v21, 4294901760
    %503 = vmatmul.mubr.f32.gmra.mrb[0].mxu0 %v502
    %v504 = vpop.f32.mrb[0].mxu0
    %v505 = vadd.f32 %v430, %v504
    %v506 = vpop.f32.mrb[0].mxu0
    %507 = vdwg.mxu0
    %p508 = scmp.eq.s32.totalorder 0, 0
    // Predicated region
    $region10: #{linear_classifier_forward.1} parent=1 // pred_check
      %p509 = pneg %p508
    $region11: #{linear_classifier_forward.1} parent=1 // pred_check_branch
      %511 = sbr.rel (%p509) target = $region13
    $region12: #{linear_classifier_forward.1} parent=1 // pred_region
      %vm512 = vcmask 130048
      %513 = vst.msk [vmem:[#allocation4] sm:$0xff] %vm512, %v505
    $region13: #{linear_classifier_forward.1} parent=1 // pred_fallthru
      _
    %p514 = scmp.gt.s32.totalorder 0, 0
    // Predicated region
    $region14: #{linear_classifier_forward.1} parent=1 // pred_check
      %p515 = pneg %p514
    $region15: #{linear_classifier_forward.1} parent=1 // pred_check_branch
      %517 = sbr.rel (%p515) target = $region17
    $region16: #{linear_classifier_forward.1} parent=1 // pred_region
      %v518 = vld [vmem:[#allocation4] sm:$0xff]
      %v519 = vadd.f32 %v518, %v505
      %vm520 = vcmask 130048
      %521 = vst.msk [vmem:[#allocation4] sm:$0xff] %vm520, %v519
    $region17: #{linear_classifier_forward.1} parent=1 // pred_fallthru
      _
    // Predicated region
    $region18: #{linear_classifier_forward.1} parent=1 // pred_check
      %p522 = pneg %p508
    $region19: #{linear_classifier_forward.1} parent=1 // pred_check_branch
      %524 = sbr.rel (%p522) target = $region21
    $region20: #{linear_classifier_forward.1} parent=1 // pred_region
      %v525 = vld [vmem:[#allocation4] sm:$0xff]
      %s526 = sld [smem:[#allocation3]]
      %v527 = vstv %s526
      %v528 = vadd.f32 %v525, %v527
      %v529 = vxor.u32 %v528, 2147483648
      %v530 = vmul.f32 %v529, 1.442695
      %v531 = vpow.pop %v530
      %v532 = vadd.f32 %v531, 1.0
      %v533 = vrcp.pop %v532
      %v534 = vmul.f32 1.0, %v533
      %vm535 = vcmask 130048
      %536 = vst.msk [vmem:[#allocation4] sm:$0xff] %vm535, %v534
    $region21: #{linear_classifier_forward.1} parent=1 // pred_fallthru
      _
    // Predicated region
    $region22: #{linear_classifier_forward.1} parent=1 // pred_check
      _
    $region23: #{linear_classifier_forward.1} parent=1 // pred_check_branch
      %538 = sbr.rel (0) target = $region25
    $region24: #{linear_classifier_forward.1} parent=1 // pred_region
      %s540 = ssub.s32 128, 128
      %541 = vsyncadd [#allocation5], %s540
      %s543 = sshll.u32 [#allocation4], 4
      %s544 = int_to_ptr.vmem [resolvable:$true] %s543
      %546 = dma.vmem_to_hbm [thread:$0]  %s544, 128, %s3, [#allocation5]
    $region25: #{linear_classifier_forward.1} parent=1 // pred_fallthru
      _
    // Predicated region
    $region26: #{linear_classifier_forward.1} parent=1 // pred_check
      _
    $region27: #{linear_classifier_forward.1} parent=1 // pred_check_branch
      %548 = sbr.rel (0) target = $region29
    $region28: #{linear_classifier_forward.1} parent=1 // pred_region
      %549 = dma.done [#allocation5], 128
    $region29: #{linear_classifier_forward.1} parent=1 // pred_fallthru
      _
    %550 = vsyncpa [#allocation5], 1

</llo_original>
